<compile_context>
chip_gen: v5e
topology: v5e:2x2
jax: 0.10.0
libtpu: 0.0.40
codegen_flags: <defaults>
</compile_context>

<pallas_src>
import jax
import jax.numpy as jnp
from jax import lax
from jax.experimental import pallas as pl
from jax.experimental.pallas import tpu as pltpu

IN_DIM = 5
HID_DIM = 64
OUT_DIM = 5
MAX_TILE_B = 32768  # peak per-step VMEM (I/O bufs + (64, tb) f32 hidden) < ~20 MiB


def rating_classifier_kernel(x_ref, w1_ref, b1_ref, w2_ref, b2_ref, o_ref):
    # x_ref:  (IN_DIM,  TB) bf16     batch on the lane axis
    # w1_ref: (IN_DIM, HID_DIM) bf16     b1_ref: (HID_DIM, 1) f32
    # w2_ref: (HID_DIM, OUT_DIM) bf16    b2_ref: (OUT_DIM, 1) f32
    # o_ref:  (OUT_DIM, TB) out dtype
    contract0 = (((0,), (0,)), ((), ()))  # contract dim 0 of both operands

    # fc1 + ReLU: bf16 MXU operands, f32 accumulate, f32 elementwise
    h = lax.dot_general(w1_ref[...], x_ref[...], contract0,
                        preferred_element_type=jnp.float32)          # (HID, TB)
    h = jnp.maximum(h + b1_ref[...], 0.0)

    # fc2: cast the moving operand to bf16 (fewer MXU passes / vregs per 128 lanes)
    logits = lax.dot_general(w2_ref[...], h.astype(jnp.bfloat16), contract0,
                             preferred_element_type=jnp.float32)     # (OUT, TB)
    logits = logits + b2_ref[...]

    # numerically stable softmax over the feature (sublane) axis
    m = jnp.max(logits, axis=0, keepdims=True)
    e = jnp.exp(logits - m)
    denom = jnp.sum(e, axis=0, keepdims=True)
    o_ref[...] = (e * pl.reciprocal(denom, approx=False)).astype(o_ref.dtype)


def _round_up(n, m):
    return ((n + m - 1) // m) * m


def _pick_tile(b_padded, max_tile):
    # keep >= 2 grid steps when B allows it (v7x megacore), cap per-step VMEM
    tb = max(128, _round_up(pl.cdiv(b_padded, 2), 128))
    return min(tb, max_tile, b_padded)


def rating_classifier(x, w1, b1, w2, b2, *, max_tile_b=MAX_TILE_B):
    """x: (B, 5); w1: (64, 5); b1: (64,); w2: (5, 64); b2: (5,) -> (B, 5) softmax probs."""
    B = x.shape[0]
    out_dtype = x.dtype

    b_padded = _round_up(B, 128)            # pad batch only to a lane multiple
    tb = _pick_tile(b_padded, max_tile_b)
    grid = (pl.cdiv(b_padded, tb),)         # ragged last tile is handled by Pallas

    # Layout plumbing: batch -> lane axis, fused with the bf16 downcast.
    x_t = jnp.transpose(x).astype(jnp.bfloat16)              # (IN_DIM, B)
    if b_padded != B:
        x_t = jnp.pad(x_t, ((0, 0), (0, b_padded - B)))      # zero cols, sliced off

    w1_t = jnp.transpose(w1).astype(jnp.bfloat16)             # (IN_DIM, HID_DIM)
    w2_t = jnp.transpose(w2).astype(jnp.bfloat16)             # (HID_DIM, OUT_DIM)
    b1c = jnp.reshape(b1, (HID_DIM, 1)).astype(jnp.float32)
    b2c = jnp.reshape(b2, (OUT_DIM, 1)).astype(jnp.float32)

    out_bytes = B * OUT_DIM * jnp.dtype(out_dtype).itemsize
    cost = pl.CostEstimate(
        flops=2 * B * (IN_DIM * HID_DIM + HID_DIM * OUT_DIM),
        transcendentals=B * OUT_DIM,
        bytes_accessed=(x_t.size * 2 + out_bytes
                        + (w1.size + w2.size) * 2 + (b1.size + b2.size) * 4),
    )

    out_t = pl.pallas_call(
        rating_classifier_kernel,
        out_shape=jax.ShapeDtypeStruct((OUT_DIM, b_padded), out_dtype),
        grid=grid,
        in_specs=[
            pl.BlockSpec((IN_DIM, tb), lambda i: (0, i)),        # x tile, lane-dense
            pl.BlockSpec((IN_DIM, HID_DIM), lambda i: (0, 0)),   # W1^T resident
            pl.BlockSpec((HID_DIM, 1), lambda i: (0, 0)),        # b1 resident
            pl.BlockSpec((HID_DIM, OUT_DIM), lambda i: (0, 0)),  # W2^T resident
            pl.BlockSpec((OUT_DIM, 1), lambda i: (0, 0)),        # b2 resident
        ],
        out_specs=pl.BlockSpec((OUT_DIM, tb), lambda i: (0, i)),
        compiler_params=pltpu.CompilerParams(
            dimension_semantics=("parallel",),    # shard batch tiles over v7x's 2 TCs
            vmem_limit_bytes=32 * 1024 * 1024,    # actual need (<~20 MiB) + headroom
        ),
        cost_estimate=cost,
    )(x_t, w1_t, b1c, w2_t, b2c)

    return jnp.transpose(out_t[:, :B]).astype(out_dtype)


def init_params(key):
    # PyTorch nn.Linear-native layout: W is (out_features, in_features).
    k1, k2, k3, k4 = jax.random.split(key, 4)
    bound1 = 1.0 / jnp.sqrt(IN_DIM)
    bound2 = 1.0 / jnp.sqrt(HID_DIM)
    w1 = jax.random.uniform(k1, (HID_DIM, IN_DIM), jnp.float32, -bound1, bound1)
    b1 = jax.random.uniform(k2, (HID_DIM,), jnp.float32, -bound1, bound1)
    w2 = jax.random.uniform(k3, (OUT_DIM, HID_DIM), jnp.float32, -bound2, bound2)
    b2 = jax.random.uniform(k4, (OUT_DIM,), jnp.float32, -bound2, bound2)
    return w1, b1, w2, b2


def _reference(x, w1, b1, w2, b2):
    h = jnp.maximum(x @ w1.T + b1, 0.0)
    return jax.nn.softmax(h @ w2.T + b2, axis=1)


if __name__ == "__main__":
    key = jax.random.PRNGKey(0)
    kx, kp, kx2 = jax.random.split(key, 3)
    w1, b1, w2, b2 = init_params(kp)

    fwd = jax.jit(rating_classifier)

    # small batch: single 128-lane tile, grid = 1
    B = 8
    x = jax.random.normal(kx, (B, IN_DIM), jnp.float32)
    out = fwd(x, w1, b1, w2, b2)
    jax.block_until_ready(out)
    ref = _reference(x, w1, b1, w2, b2)
    assert out.shape == (B, OUT_DIM)
    # bf16 MXU operands -> relaxed elementwise tolerance; normalization is exact f32
    assert jnp.allclose(out, ref, atol=2e-2, rtol=2e-2)
    assert jnp.allclose(jnp.sum(out, axis=1), 1.0, atol=1e-3)

    # slightly larger batch: exercises multi-step grid + ragged last tile
    B2 = 300
    x2 = jax.random.normal(kx2, (B2, IN_DIM), jnp.float32)
    out2 = fwd(x2, w1, b1, w2, b2)
    jax.block_until_ready(out2)
    ref2 = _reference(x2, w1, b1, w2, b2)
    assert out2.shape == (B2, OUT_DIM)
    assert jnp.allclose(out2, ref2, atol=2e-2, rtol=2e-2)
    assert jnp.allclose(jnp.sum(out2, axis=1), 1.0, atol=1e-3)

    print("KERNEL_OK")
</pallas_src>

<mosaic_0001>
module attributes {stable_mosaic.version = 11 : i64} {
  func.func @rating_classifier_kernel(%arg0: i32, %arg1: memref<5x128xbf16, #tpu.memory_space<vmem>>, %arg2: memref<5x64xbf16, #tpu.memory_space<vmem>>, %arg3: memref<64x1xf32, #tpu.memory_space<vmem>>, %arg4: memref<64x5xbf16, #tpu.memory_space<vmem>>, %arg5: memref<5x1xf32, #tpu.memory_space<vmem>>, %arg6: memref<5x128xf32, #tpu.memory_space<vmem>>) attributes {dimension_semantics = [#tpu.dimension_semantics<parallel>], iteration_bounds = array<i64: 1>, scalar_prefetch = 0 : i64, scratch_operands = 0 : i64, tpu.core_type = #tpu.core_type<tc>, window_params = [{transform_indices = @transform_0, window_bounds = array<i64: 5, 128>}, {pipeline_mode = #tpu.pipeline_mode<synchronous>, transform_indices = @transform_1, window_bounds = array<i64: 5, 64>}, {pipeline_mode = #tpu.pipeline_mode<synchronous>, transform_indices = @transform_2, window_bounds = array<i64: 64, 1>}, {pipeline_mode = #tpu.pipeline_mode<synchronous>, transform_indices = @transform_3, window_bounds = array<i64: 64, 5>}, {pipeline_mode = #tpu.pipeline_mode<synchronous>, transform_indices = @transform_4, window_bounds = array<i64: 5, 1>}, {transform_indices = @transform_5, window_bounds = array<i64: 5, 128>}]} {
    %c0 = arith.constant 0 : index
    %c0_0 = arith.constant 0 : index
    %0 = vector.load %arg2[%c0, %c0_0] : memref<5x64xbf16, #tpu.memory_space<vmem>>, vector<5x64xbf16>
    %c0_1 = arith.constant 0 : index
    %c0_2 = arith.constant 0 : index
    %1 = vector.load %arg1[%c0_1, %c0_2] : memref<5x128xbf16, #tpu.memory_space<vmem>>, vector<5x128xbf16>
    %cst = arith.constant dense<0.000000e+00> : vector<64x128xf32>
    %2 = tpu.matmul %0, %1, %cst {dimension_numbers = #tpu.dot_dimension_numbers<[0], [0], [1], [1], [0, 1, 1, 1], [], []>} : vector<5x64xbf16>, vector<5x128xbf16>, vector<64x128xf32> -> vector<64x128xf32>
    %c0_3 = arith.constant 0 : index
    %c0_4 = arith.constant 0 : index
    %3 = vector.load %arg3[%c0_3, %c0_4] : memref<64x1xf32, #tpu.memory_space<vmem>>, vector<64x1xf32>
    %4 = vector.broadcast %3 : vector<64x1xf32> to vector<64x128xf32>
    %5 = arith.addf %2, %4 : vector<64x128xf32>
    %cst_5 = arith.constant 0.000000e+00 : f32
    %6 = vector.broadcast %cst_5 : f32 to vector<64x128xf32>
    %7 = arith.maximumf %5, %6 : vector<64x128xf32>
    %c0_6 = arith.constant 0 : index
    %c0_7 = arith.constant 0 : index
    %8 = vector.load %arg4[%c0_6, %c0_7] : memref<64x5xbf16, #tpu.memory_space<vmem>>, vector<64x5xbf16>
    %9 = arith.truncf %7 : vector<64x128xf32> to vector<64x128xbf16>
    %cst_8 = arith.constant dense<0.000000e+00> : vector<5x128xf32>
    %10 = tpu.matmul %8, %9, %cst_8 {dimension_numbers = #tpu.dot_dimension_numbers<[0], [0], [1], [1], [0, 1, 1, 1], [], []>} : vector<64x5xbf16>, vector<64x128xbf16>, vector<5x128xf32> -> vector<5x128xf32>
    %c0_9 = arith.constant 0 : index
    %c0_10 = arith.constant 0 : index
    %11 = vector.load %arg5[%c0_9, %c0_10] : memref<5x1xf32, #tpu.memory_space<vmem>>, vector<5x1xf32>
    %12 = vector.broadcast %11 : vector<5x1xf32> to vector<5x128xf32>
    %13 = arith.addf %10, %12 : vector<5x128xf32>
    %cst_11 = arith.constant dense<0xFF800000> : vector<128xf32>
    %14 = vector.multi_reduction <maximumf>, %13, %cst_11 [0] : vector<5x128xf32> to vector<128xf32>
    %15 = vector.shape_cast %14 : vector<128xf32> to vector<1x128xf32>
    %16 = vector.broadcast %15 : vector<1x128xf32> to vector<5x128xf32>
    %17 = arith.subf %13, %16 : vector<5x128xf32>
    %18 = math.exp %17 : vector<5x128xf32>
    %cst_12 = arith.constant dense<0.000000e+00> : vector<128xf32>
    %19 = vector.multi_reduction <add>, %18, %cst_12 [0] : vector<5x128xf32> to vector<128xf32>
    %20 = vector.shape_cast %19 : vector<128xf32> to vector<1x128xf32>
    %21 = tpu.reciprocal %20 : vector<1x128xf32> -> vector<1x128xf32>
    %22 = vector.broadcast %21 : vector<1x128xf32> to vector<5x128xf32>
    %23 = arith.mulf %18, %22 : vector<5x128xf32>
    %c0_13 = arith.constant 0 : index
    %c0_14 = arith.constant 0 : index
    %24 = vector.load %arg6[%c0_13, %c0_14] : memref<5x128xf32, #tpu.memory_space<vmem>>, vector<5x128xf32>
    tpu.vector_store %arg6[%c0_13, %c0_14], %23 {strides = array<i32>} : memref<5x128xf32, #tpu.memory_space<vmem>>, vector<5x128xf32>,
    return
  }
  func.func @transform_0(%arg0: i32) -> (i32, i32) {
    %c0_i32 = arith.constant 0 : i32
    %c0_i32_0 = arith.constant 0 : i32
    return %c0_i32, %arg0 : i32, i32
  }
  func.func @transform_1(%arg0: i32) -> (i32, i32) {
    %c0_i32 = arith.constant 0 : i32
    %c0_i32_0 = arith.constant 0 : i32
    %c0_i32_1 = arith.constant 0 : i32
    return %c0_i32, %c0_i32_0 : i32, i32
  }
  func.func @transform_2(%arg0: i32) -> (i32, i32) {
    %c0_i32 = arith.constant 0 : i32
    %c0_i32_0 = arith.constant 0 : i32
    %c0_i32_1 = arith.constant 0 : i32
    return %c0_i32, %c0_i32_0 : i32, i32
  }
  func.func @transform_3(%arg0: i32) -> (i32, i32) {
    %c0_i32 = arith.constant 0 : i32
    %c0_i32_0 = arith.constant 0 : i32
    %c0_i32_1 = arith.constant 0 : i32
    return %c0_i32, %c0_i32_0 : i32, i32
  }
  func.func @transform_4(%arg0: i32) -> (i32, i32) {
    %c0_i32 = arith.constant 0 : i32
    %c0_i32_0 = arith.constant 0 : i32
    %c0_i32_1 = arith.constant 0 : i32
    return %c0_i32, %c0_i32_0 : i32, i32
  }
  func.func @transform_5(%arg0: i32) -> (i32, i32) {
    %c0_i32 = arith.constant 0 : i32
    %c0_i32_0 = arith.constant 0 : i32
    return %c0_i32, %arg0 : i32, i32
  }
}

</mosaic_0001>

<llo_original>
// kernel: rating_classifier.1
$region0: #{rating_classifier.1}
  #allocation0 [shape = 'u32[]', space=smem, size = 0x4, offset = 0x4, fixed_abs, tag = 'smem constant byte address 0x4 - core index']
  #allocation1 [shape = 'u32[72,128]{1,0:T(1,128)}', space=vmem, size = 0x9000, scoped, tag = 'internal scratch']
  %s0 = inlined_call_operand.vmem [shape: bf16[5,128], index: 0, kind: input, shape index: {}]
  %s1 = inlined_call_operand.vmem [shape: bf16[5,64], index: 1, kind: input, shape index: {}]
  %s2 = inlined_call_operand.vmem [shape: f32[64,1], index: 2, kind: input, shape index: {}]
  %s3 = inlined_call_operand.vmem [shape: bf16[64,5], index: 3, kind: input, shape index: {}]
  %s4 = inlined_call_operand.vmem [shape: f32[5,1], index: 4, kind: input, shape index: {}]
  %s5 = inlined_call_operand.vmem [shape: f32[5,128], index: 5, kind: output, shape index: {}]
  %s6 = sld [smem:[#allocation0]]
  $region30: #{rating_classifier.1} parent=0
    _
  %s8 = ssub.s32 1, %s6
  %s9 = scalar_select 0, %s8, %s6
  // Predicated region
  $region2: #{rating_classifier.1} parent=0 // pred_check
    _
  $region3: #{rating_classifier.1} parent=0 // pred_check_branch
    %11 = sbr.rel (0) target = $region5
  $region4: #{rating_classifier.1} parent=0 // pred_region
    _
  $region5: #{rating_classifier.1} parent=0 // pred_fallthru
    _
  // Predicated region
  $region6: #{rating_classifier.1} parent=0 // pred_check
    _
  $region7: #{rating_classifier.1} parent=0 // pred_check_branch
    %13 = sbr.rel (0) target = $region9
  $region8: #{rating_classifier.1} parent=0 // pred_region
    _
  $region9: #{rating_classifier.1} parent=0 // pred_fallthru
    _
  // Predicated region
  $region10: #{rating_classifier.1} parent=0 // pred_check
    _
  $region11: #{rating_classifier.1} parent=0 // pred_check_branch
    %15 = sbr.rel (0) target = $region13
  $region12: #{rating_classifier.1} parent=0 // pred_region
    _
  $region13: #{rating_classifier.1} parent=0 // pred_fallthru
    _
  // Predicated region
  $region14: #{rating_classifier.1} parent=0 // pred_check
    _
  $region15: #{rating_classifier.1} parent=0 // pred_check_branch
    %17 = sbr.rel (0) target = $region17
  $region16: #{rating_classifier.1} parent=0 // pred_region
    _
  $region17: #{rating_classifier.1} parent=0 // pred_fallthru
    _
  // Predicated region
  $region18: #{rating_classifier.1} parent=0 // pred_check
    _
  $region19: #{rating_classifier.1} parent=0 // pred_check_branch
    %19 = sbr.rel (0) target = $region21
  $region20: #{rating_classifier.1} parent=0 // pred_region
    _
  $region21: #{rating_classifier.1} parent=0 // pred_fallthru
    _
  %v21 = vld [vmem:[%s1] sm:$0x7]
  %v22 = vld [vmem:[%s0] sm:$0x7]
  %v23 = vld [vmem:[%s2] sm:$0xff]
  %v24 = vld [vmem:[%s2 + $0x8] sm:$0xff]
  %v25 = vld [vmem:[%s2 + $0x10] sm:$0xff]
  %v26 = vld [vmem:[%s2 + $0x18] sm:$0xff]
  %v27 = vld [vmem:[%s2 + $0x20] sm:$0xff]
  %v28 = vld [vmem:[%s2 + $0x28] sm:$0xff]
  %v29 = vld [vmem:[%s2 + $0x30] sm:$0xff]
  %v30 = vld [vmem:[%s2 + $0x38] sm:$0xff]
  %32 = vset.pattern.permute.xlu0 0
  %33 = vperm.xlu0 %32, %v23
  %v34 = vpop.permute.xlu0 %33
  %37 = vset.pattern.permute.xlu0 0
  %38 = vperm.xlu0 %37, %v24
  %v39 = vpop.permute.xlu0 %38
  %42 = vset.pattern.permute.xlu0 0
  %43 = vperm.xlu0 %42, %v25
  %v44 = vpop.permute.xlu0 %43
  %47 = vset.pattern.permute.xlu0 0
  %48 = vperm.xlu0 %47, %v26
  %v49 = vpop.permute.xlu0 %48
  %52 = vset.pattern.permute.xlu0 0
  %53 = vperm.xlu0 %52, %v27
  %v54 = vpop.permute.xlu0 %53
  %57 = vset.pattern.permute.xlu0 0
  %58 = vperm.xlu0 %57, %v28
  %v59 = vpop.permute.xlu0 %58
  %62 = vset.pattern.permute.xlu0 0
  %63 = vperm.xlu0 %62, %v29
  %v64 = vpop.permute.xlu0 %63
  %67 = vset.pattern.permute.xlu0 0
  %68 = vperm.xlu0 %67, %v30
  %v69 = vpop.permute.xlu0 %68
  %71 = vxpose.xlu0.c.b16.start [1/8] %v21, 128
  %72 = vxpose.xlu0.c.b16.cont [2/8] 0, 128
  %73 = vxpose.xlu0.c.b16.cont [3/8] 0, 128
  %74 = vxpose.xlu0.c.b16.cont [4/8] 0, 128
  %75 = vxpose.xlu0.c.b16.cont [5/8] 0, 128
  %76 = vxpose.xlu0.c.b16.cont [6/8] 0, 128
  %77 = vxpose.xlu0.c.b16.cont [7/8] 0, 128
  %78 = vxpose.xlu0.c.b16.end [8/8] 0, 128
  %v79 = vpop.trf.xlu0
  %v80 = vpop.trf.xlu0
  %v81 = vpop.trf.xlu0
  %v82 = vpop.trf.xlu0
  %v83 = vpop.trf.xlu0
  %v84 = vpop.trf.xlu0
  %v85 = vpop.trf.xlu0
  %v86 = vpop.trf.xlu0
  %vm87 = vcmask 39936
  %v89 = vsel %vm87, %v79, 0
  %v92 = vsel %vm87, %v80, 0
  %v95 = vsel %vm87, %v81, 0
  %v98 = vsel %vm87, %v82, 0
  %vm100 = vcmask 1041408
  %vm101 = vcmask 1042432
  %v102 = vsel %vm100, 4294967295, 65535
  %v103 = vsel %vm101, %v102, 0
  %v105 = vand.u32 %v22, %v103
  %107 = vmatpush.bf16.msra.mxu0 0
  %108 = vmatpush.bf16.msra.mxu0 0
  %109 = vmatpush.bf16.msra.mxu0 0
  %110 = vmatpush.bf16.msra.mxu0 0
  %111 = vmatpush.bf16.msra.mxu0 0
  %112 = vmatpush.bf16.msra.mxu0 0
  %113 = vmatpush.bf16.msra.mxu0 0
  %114 = vmatpush.bf16.msra.mxu0 %v105
  %115 = vmatmul.bf16.gmra.mxu0 %v89
  %v116 = vpop.f32.mrf.mxu0
  %v117 = vadd.f32 %v34, %v116
  %v118 = vpop.f32.mrf.mxu0
  %v119 = vadd.f32 %v39, %v118
  %120 = vmatmul.bf16.gmra.mxu0 %v92
  %v121 = vpop.f32.mrf.mxu0
  %v122 = vadd.f32 %v44, %v121
  %v123 = vpop.f32.mrf.mxu0
  %v124 = vadd.f32 %v49, %v123
  %125 = vmatmul.bf16.gmra.mxu0 %v95
  %v126 = vpop.f32.mrf.mxu0
  %v127 = vadd.f32 %v54, %v126
  %v128 = vpop.f32.mrf.mxu0
  %v129 = vadd.f32 %v59, %v128
  %130 = vmatmul.bf16.gmra.mxu0 %v98
  %v131 = vpop.f32.mrf.mxu0
  %v132 = vadd.f32 %v64, %v131
  %v133 = vpop.f32.mrf.mxu0
  %v134 = vadd.f32 %v69, %v133
  %135 = vdwg.mxu0
  %v136 = vmax.f32 %v117, 0.0
  %v137 = vmax.f32 %v119, 0.0
  %v138 = vmax.f32 %v122, 0.0
  %v139 = vmax.f32 %v124, 0.0
  %v140 = vmax.f32 %v127, 0.0
  %v141 = vmax.f32 %v129, 0.0
  %v142 = vmax.f32 %v132, 0.0
  %v143 = vmax.f32 %v134, 0.0
  %v144 = vld [vmem:[%s3] sm:$0xf]
  %v145 = vld [vmem:[%s3 + $0x4] sm:$0xf]
  %v146 = vld [vmem:[%s3 + $0x8] sm:$0xf]
  %v147 = vld [vmem:[%s3 + $0xc] sm:$0xf]
  %v148 = vld [vmem:[%s3 + $0x10] sm:$0xf]
  %v149 = vld [vmem:[%s3 + $0x14] sm:$0xf]
  %v150 = vld [vmem:[%s3 + $0x18] sm:$0xf]
  %v151 = vld [vmem:[%s3 + $0x1c] sm:$0xf]
  %v152 = vpack.c.bf16 %v137, %v136
  %v153 = vpack.c.bf16 %v139, %v138
  %v154 = vpack.c.bf16 %v141, %v140
  %v155 = vpack.c.bf16 %v143, %v142
  %v156 = vld [vmem:[%s4] sm:$0x1f]
  %158 = vset.pattern.permute.xlu0 0
  %159 = vperm.xlu0 %158, %v156
  %v160 = vpop.permute.xlu0 %159
  %v170 = vunpack.c.l.b16 %v144
  %v171 = vunpack.c.l.b16 %v145
  %v172 = vunpack.c.l.b16 %v146
  %v173 = vunpack.c.l.b16 %v147
  %v174 = vunpack.c.l.b16 %v148
  %v175 = vunpack.c.l.b16 %v149
  %v176 = vunpack.c.l.b16 %v150
  %v177 = vunpack.c.l.b16 %v151
  %v178 = vpack.c.b16 %v171, %v170
  %v179 = vpack.c.b16 %v173, %v172
  %v180 = vpack.c.b16 %v175, %v174
  %v181 = vpack.c.b16 %v177, %v176
  %186 = vxpose.xlu0.c.b16.start [1/8] %v178, 128
  %187 = vxpose.xlu0.c.b16.cont [2/8] %v179, 128
  %188 = vxpose.xlu0.c.b16.cont [3/8] %v180, 128
  %189 = vxpose.xlu0.c.b16.cont [4/8] %v181, 128
  %190 = vxpose.xlu0.c.b16.cont [5/8] 0, 128
  %191 = vxpose.xlu0.c.b16.cont [6/8] 0, 128
  %192 = vxpose.xlu0.c.b16.cont [7/8] 0, 128
  %193 = vxpose.xlu0.c.b16.end [8/8] 0, 128
  %v194 = vpop.trf.xlu0
  %v195 = vpop.trf.xlu0
  %v196 = vpop.trf.xlu0
  %v197 = vpop.trf.xlu0
  %v198 = vpop.trf.xlu0
  %v199 = vpop.trf.xlu0
  %v200 = vpop.trf.xlu0
  %v201 = vpop.trf.xlu0
  %vm202 = vcmask 523264
  %v204 = vsel %vm202, %v194, 0
  %206 = vmatpush.bf16.msra.mxu0 0
  %207 = vmatpush.bf16.msra.mxu0 0
  %208 = vmatpush.bf16.msra.mxu0 0
  %209 = vmatpush.bf16.msra.mxu0 0
  %210 = vmatpush.bf16.msra.mxu0 %v155
  %211 = vmatpush.bf16.msra.mxu0 %v154
  %212 = vmatpush.bf16.msra.mxu0 %v153
  %213 = vmatpush.bf16.msra.mxu0 %v152
  %214 = vmatmul.bf16.gmra.mxu0 %v204
  %v215 = vpop.f32.mrf.mxu0
  %v216 = vadd.f32 %v160, %v215
  %v217 = vpop.f32.mrf.mxu0
  %218 = vdwg.mxu0
  %vm219 = vcmask 1044480
  %v220 = vsel %vm219, %v216, -inf
  %v221 = vrot.slane %v220, 4
  %v222 = vmax.f32 %v220, %v221
  %v223 = vrot.slane %v222, 2
  %v224 = vmax.f32 %v222, %v223
  %v225 = vrot.slane %v224, 1
  %v226 = vmax.f32 %v224, %v225
  %v227 = vsub.f32 %v216, %v226
  %v228 = vmul.f32 %v227, 1.442695
  %v229 = vpow.pop %v228
  %v230 = vsel %vm219, %v229, 0.0
  %v231 = vrot.slane %v230, 4
  %v232 = vadd.f32 %v230, %v231
  %v233 = vrot.slane %v232, 2
  %v234 = vadd.f32 %v232, %v233
  %v235 = vrot.slane %v234, 1
  %v236 = vadd.f32 %v234, %v235
  %v237 = vrcp.pop %v236
  %v238 = vmul.f32 %v236, %v237
  %v239 = vsub.f32 1.0, %v238
  %v240 = vmul.f32 %v237, %v239
  %v241 = vadd.f32 %v237, %v240
  %vm242 = vweird.f32 %v236
  %vm243 = vweird.f32 %v237
  %vm244 = vmor %vm242, %vm243
  %v245 = vsel %vm244, %v237, %v241
  %v246 = vand.u32 2147483647, %v236
  %vm247 = vcmp.eq.f32.partialorder %v246, 8.507059e+37
  %v248 = vand.u32 %v236, 2147483648
  %v249 = vor.u32 1.1754944e-38, %v248
  %v250 = vsel %vm247, %v249, %v245
  %v251 = vmul.f32 %v229, %v250
  %252 = vst [vmem:[%s5] sm:$0x1f] %v251
  // Predicated region
  $region22: #{rating_classifier.1} parent=0 // pred_check
    _
  $region23: #{rating_classifier.1} parent=0 // pred_check_branch
    %254 = sbr.rel (0) target = $region25
  $region24: #{rating_classifier.1} parent=0 // pred_region
    _
  $region25: #{rating_classifier.1} parent=0 // pred_fallthru
    _
  // Predicated region
  $region26: #{rating_classifier.1} parent=0 // pred_check
    _
  $region27: #{rating_classifier.1} parent=0 // pred_check_branch
    %256 = sbr.rel (0) target = $region29
  $region28: #{rating_classifier.1} parent=0 // pred_region
    _
  $region29: #{rating_classifier.1} parent=0 // pred_fallthru
    _

</llo_original>
